<compile_context>
chip_gen: v6e
topology: v6e:2x2x1
jax: 0.10.0
libtpu: 0.0.40
codegen_flags: <defaults>
</compile_context>

<pallas_src>
import functools

import jax
import jax.numpy as jnp
from jax.experimental import pallas as pl
from jax.experimental.pallas import tpu as pltpu


_TARGET_BLOCK_BYTES = 4 * 1024 * 1024   # ~4 MiB x-block; x/out/pe double-buffered
                                        # <= ~24 MiB VMEM (explicit limit set below).
_SMALL_INPUT_BYTES = 256 * 1024         # below this, plain JAX beats a pallas_call.


def _round_up(v: int, m: int) -> int:
    return ((v + m - 1) // m) * m


def _sublane(dtype) -> int:
    # Sublane multiple: f32 -> 8, bf16 -> 16, int8/fp8 -> 32.
    return max(8, 32 // jnp.dtype(dtype).itemsize)


def build_positional_encoding(d_model: int, max_seq_len: int,
                              dtype=jnp.float32) -> jnp.ndarray:
    """Replicates the PyTorch __init__ buffer. Shape (1, max_seq_len, d_model)."""
    assert d_model % 2 == 0
    i_seq = jnp.linspace(0.0, max_seq_len - 1, max_seq_len)      # (S,)
    j_seq = jnp.linspace(0.0, d_model - 2, d_model // 2)         # (D/2,): 0,2,...
    pos, two_i = jnp.meshgrid(i_seq, j_seq, indexing="ij")       # (S, D/2)
    denom = jnp.power(10000.0, two_i / d_model)
    pe_2i = jnp.sin(pos / denom)
    pe_2i_1 = jnp.cos(pos / denom)
    pe = jnp.stack((pe_2i, pe_2i_1), axis=2).reshape(1, max_seq_len, d_model)
    return pe.astype(dtype)


def _pe_add_kernel(x_ref, pe_ref, o_ref, *, scale: float):
    # Elementwise hot path. x_ref: (nb, rt, cols), pe_ref: (1, rt, cols);
    # the add broadcasts the pe tile over the folded batch dim.
    # `scale` is a Python float, so the multiply stays in x's dtype.
    o_ref[...] = x_ref[...] * scale + pe_ref[...]


def _pe_add_pallas(x_view: jnp.ndarray, pe_view: jnp.ndarray, scale: float,
                   *, block_bytes: int = _TARGET_BLOCK_BYTES) -> jnp.ndarray:
    """out = x_view * scale + pe_view (broadcast over batch). Shapes (n,R,C)/(1,R',C)."""
    n, rows, cols = x_view.shape
    dtype = x_view.dtype
    itemsize = jnp.dtype(dtype).itemsize
    sub = _sublane(dtype)

    slab_bytes = rows * cols * itemsize          # one batch element's data

    if slab_bytes <= block_bytes:
        # One row tile spanning all rows; fold as many batch elements as fit so
        # the fixed per-grid-step overhead is amortized over large blocks.
        rt = rows
        nb = min(n, max(1, block_bytes // slab_bytes))
    else:
        # One batch element per block; balanced, sublane-aligned row tiles
        # (avoids a tiny ragged tail tile).
        nb = 1
        per_row_bytes = cols * itemsize
        rows_budget = max(sub, (max(1, block_bytes // per_row_bytes) // sub) * sub)
        nt = max(1, pl.cdiv(rows, rows_budget))
        rt = _round_up(pl.cdiv(rows, nt), sub)
        if rt >= rows:
            rt = rows                            # full-extent tile is always legal
    num_row_tiles = pl.cdiv(rows, rt)
    num_batch_chunks = pl.cdiv(n, nb)

    # Explicit scoped-VMEM budget: x/out/pe double-buffered, ~50% headroom,
    # clamped to stay safe on v5e (small default limit) and v7x (64 MiB physical).
    block_x = nb * rt * cols * itemsize
    block_pe = rt * cols * itemsize
    vmem_need = 2 * (2 * block_x + block_pe)
    vmem_limit = int(min(max(vmem_need * 3 // 2 + (1 << 20), 32 << 20), 48 << 20))

    kernel = functools.partial(_pe_add_kernel, scale=scale)
    cost = pl.CostEstimate(
        flops=2 * n * rows * cols,
        transcendentals=0,
        bytes_accessed=(2 * n * rows * cols + rows * cols) * itemsize,
    )

    return pl.pallas_call(
        kernel,
        out_shape=jax.ShapeDtypeStruct((n, rows, cols), dtype),
        grid_spec=pltpu.PrefetchScalarGridSpec(
            num_scalar_prefetch=0,
            # Row tiles OUTER, batch chunks INNER: pe's block index only changes
            # when the row tile changes -> the broadcast table is DMA'd once per
            # row tile, not once per (tile, batch-chunk) step.
            grid=(num_row_tiles, num_batch_chunks),
            in_specs=[
                pl.BlockSpec((nb, rt, cols), lambda r, b: (b, r, 0)),   # x
                pl.BlockSpec((1, rt, cols), lambda r, b: (0, r, 0)),    # pe (bcast)
            ],
            out_specs=pl.BlockSpec((nb, rt, cols), lambda r, b: (b, r, 0)),
        ),
        compiler_params=pltpu.CompilerParams(
            # Fully independent steps -> v7x's two TensorCores can split the grid.
            dimension_semantics=("parallel", "parallel"),
            vmem_limit_bytes=vmem_limit,
        ),
        cost_estimate=cost,
    )(x_view, pe_view)


class PositionalEncodingPallas:
    """JAX/Pallas equivalent of the PyTorch PositionalEncoding module."""

    def __init__(self, d_model: int, max_seq_len: int, dtype=jnp.float32,
                 block_bytes: int = _TARGET_BLOCK_BYTES):
        assert d_model % 2 == 0
        self.d_model = d_model
        self.max_seq_len = max_seq_len
        self.dtype = jnp.dtype(dtype)
        self.block_bytes = block_bytes
        # Store pe in the model dtype so the per-call cast is a no-op.
        self.pe = build_positional_encoding(d_model, max_seq_len, dtype)
        # Cache of prepared (lane-dense) pe views keyed by (seq_len, dtype):
        # this hoists all per-call pe slice/reshape/pad copies out of forward.
        self._pe_cache = {}

    def _prepared_pe(self, seq_len: int, dtype):
        key = (int(seq_len), jnp.dtype(dtype).name)
        if key in self._pe_cache:
            return self._pe_cache[key]

        d = self.d_model
        pe = self.pe.astype(dtype)               # no-op when dtype == model dtype
        sub = _sublane(dtype)
        if d % 128 == 0:
            # Lane-dense already. Keep the FULL buffer (no slice copy) whenever a
            # sublane-aligned row tiling is legal against it; otherwise take a
            # one-time cached slice so full-extent row tiles stay layout-legal.
            if seq_len % sub == 0 or seq_len == pe.shape[1]:
                view = pe
            else:
                view = pe[:, :seq_len, :]
            entry = (view, seq_len, d, "dense")
        elif (seq_len * d) % 128 == 0:
            # Re-view rows as (S*D/128, 128) so stores are full-width unmasked vst.
            rows = (seq_len * d) // 128
            entry = (pe[:, :seq_len, :].reshape(1, rows, 128), rows, 128, "reshape")
        else:
            # Pad last dim up to 128 multiple (lane-dense) instead of emitting
            # masked partial stores; output is sliced back after the kernel.
            cols = _round_up(d, 128)
            padded = jnp.pad(pe[:, :seq_len, :], ((0, 0), (0, 0), (0, cols - d)))
            entry = (padded, seq_len, cols, "pad")

        self._pe_cache[key] = entry
        return entry

    def __call__(self, x: jnp.ndarray, *, force_pallas: bool = False) -> jnp.ndarray:
        n, seq_len, d_model = x.shape
        assert seq_len <= self.pe.shape[1]
        assert d_model == self.d_model
        scale = float(d_model) ** 0.5
        itemsize = jnp.dtype(x.dtype).itemsize

        # Small-input fast path: pallas_call launch + pipeline setup would
        # dominate; XLA's fused elementwise is faster for tiny tensors.
        if (not force_pallas) and n * seq_len * d_model * itemsize <= _SMALL_INPUT_BYTES:
            return x * scale + self.pe[:, :seq_len, :].astype(x.dtype)

        pe_view, rows, cols, mode = self._prepared_pe(seq_len, x.dtype)
        if mode == "dense":
            x_view = x
        elif mode == "reshape":
            x_view = x.reshape(n, rows, cols)     # contiguous re-view, effectively free
        else:  # "pad"
            x_view = jnp.pad(x, ((0, 0), (0, 0), (0, cols - d_model)))

        out = _pe_add_pallas(x_view, pe_view, scale, block_bytes=self.block_bytes)

        if mode == "reshape":
            return out.reshape(n, seq_len, d_model)
        if mode == "pad":
            return out[:, :, :d_model]
        return out


if __name__ == "__main__":
    key = jax.random.PRNGKey(0)
    k1, k2, k3, k4, k5 = jax.random.split(key, 5)

    # 1) d_model not a multiple of 128 -> lane-dense (S*D/128, 128) re-view path.
    b1, s1, d1, m1 = 2, 8, 32, 16
    mod1 = PositionalEncodingPallas(d1, m1)
    x1 = jax.random.normal(k1, (b1, s1, d1), dtype=jnp.float32)
    out1 = jax.block_until_ready(mod1(x1, force_pallas=True))
    ref1 = x1 * (d1 ** 0.5) + mod1.pe[:, :s1, :]
    assert out1.shape == (b1, s1, d1)
    assert jnp.allclose(out1, ref1, atol=1e-5, rtol=1e-5)

    # 2) lane-dense d_model, seq_len < max_seq_len -> un-sliced full-pe-buffer path,
    #    batch folded into one block.
    b2, s2, d2, m2 = 2, 16, 128, 32
    mod2 = PositionalEncodingPallas(d2, m2)
    x2 = jax.random.normal(k2, (b2, s2, d2), dtype=jnp.float32)
    out2 = jax.block_until_ready(mod2(x2, force_pallas=True))
    ref2 = x2 * (d2 ** 0.5) + mod2.pe[:, :s2, :]
    assert jnp.allclose(out2, ref2, atol=1e-5, rtol=1e-5)

    # 3) ragged-tail row tiling: a tiny block budget forces rt=8 over rows=20,
    #    exercising partial blocks on both the row and batch-chunk axes.
    b3, s3, d3, m3 = 3, 20, 128, 32
    mod3 = PositionalEncodingPallas(d3, m3, block_bytes=4096)
    x3 = jax.random.normal(k3, (b3, s3, d3), dtype=jnp.float32)
    out3 = jax.block_until_ready(mod3(x3, force_pallas=True))
    ref3 = x3 * (d3 ** 0.5) + mod3.pe[:, :s3, :]
    assert jnp.allclose(out3, ref3, atol=1e-5, rtol=1e-5)

    # 4) d_model and S*D both non-multiples of 128 -> padded lane-dense path.
    b4, s4, d4, m4 = 3, 7, 48, 10
    mod4 = PositionalEncodingPallas(d4, m4)
    x4 = jax.random.normal(k4, (b4, s4, d4), dtype=jnp.float32)
    out4 = jax.block_until_ready(mod4(x4, force_pallas=True))
    ref4 = x4 * (d4 ** 0.5) + mod4.pe[:, :s4, :]
    assert out4.shape == (b4, s4, d4)
    assert jnp.allclose(out4, ref4, atol=1e-5, rtol=1e-5)

    # 5) bf16: dtype-matched pe, bf16 arithmetic end to end.
    b5, s5, d5, m5 = 2, 16, 128, 32
    mod5 = PositionalEncodingPallas(d5, m5, dtype=jnp.bfloat16)
    x5 = jax.random.normal(k5, (b5, s5, d5), dtype=jnp.bfloat16)
    out5 = jax.block_until_ready(mod5(x5, force_pallas=True))
    ref5 = x5 * (d5 ** 0.5) + mod5.pe[:, :s5, :]
    assert jnp.allclose(out5.astype(jnp.float32), ref5.astype(jnp.float32),
                        atol=2e-1, rtol=5e-2)

    # 6) small-input fast path (plain JAX, no pallas_call).
    out6 = jax.block_until_ready(mod1(x1))
    assert jnp.allclose(out6, ref1, atol=1e-5, rtol=1e-5)

    print("KERNEL_OK")
</pallas_src>

<mosaic_0001>
module attributes {stable_mosaic.version = 11 : i64} {
  func.func @_pe_add_kernel(%arg0: i32, %arg1: i32, %arg2: memref<2x2x128xf32, #tpu.memory_space<vmem>>, %arg3: memref<1x2x128xf32, #tpu.memory_space<vmem>>, %arg4: memref<2x2x128xf32, #tpu.memory_space<vmem>>) attributes {dimension_semantics = [#tpu.dimension_semantics<parallel>, #tpu.dimension_semantics<parallel>], iteration_bounds = array<i64: 1, 1>, scalar_prefetch = 0 : i64, scratch_operands = 0 : i64, tpu.core_type = #tpu.core_type<tc>, window_params = [{transform_indices = @transform_0, window_bounds = array<i64: 2, 2, 128>}, {transform_indices = @transform_1, window_bounds = array<i64: 1, 2, 128>}, {transform_indices = @transform_2, window_bounds = array<i64: 2, 2, 128>}]} {
    %c0 = arith.constant 0 : index
    %c0_0 = arith.constant 0 : index
    %c0_1 = arith.constant 0 : index
    %0 = vector.load %arg2[%c0, %c0_0, %c0_1] : memref<2x2x128xf32, #tpu.memory_space<vmem>>, vector<2x2x128xf32>
    %cst = arith.constant 5.65685415 : f32
    %1 = vector.broadcast %cst : f32 to vector<2x2x128xf32>
    %2 = arith.mulf %0, %1 : vector<2x2x128xf32>
    %c0_2 = arith.constant 0 : index
    %c0_3 = arith.constant 0 : index
    %c0_4 = arith.constant 0 : index
    %3 = vector.load %arg3[%c0_2, %c0_3, %c0_4] : memref<1x2x128xf32, #tpu.memory_space<vmem>>, vector<1x2x128xf32>
    %4 = vector.broadcast %3 : vector<1x2x128xf32> to vector<2x2x128xf32>
    %5 = arith.addf %2, %4 : vector<2x2x128xf32>
    %c0_5 = arith.constant 0 : index
    %c0_6 = arith.constant 0 : index
    %c0_7 = arith.constant 0 : index
    %6 = vector.load %arg4[%c0_5, %c0_6, %c0_7] : memref<2x2x128xf32, #tpu.memory_space<vmem>>, vector<2x2x128xf32>
    tpu.vector_store %arg4[%c0_5, %c0_6, %c0_7], %5 {strides = array<i32>} : memref<2x2x128xf32, #tpu.memory_space<vmem>>, vector<2x2x128xf32>,
    return
  }
  func.func @transform_0(%arg0: i32, %arg1: i32) -> (i32, i32, i32) {
    %c0_i32 = arith.constant 0 : i32
    %c0_i32_0 = arith.constant 0 : i32
    return %arg1, %arg0, %c0_i32 : i32, i32, i32
  }
  func.func @transform_1(%arg0: i32, %arg1: i32) -> (i32, i32, i32) {
    %c0_i32 = arith.constant 0 : i32
    %c0_i32_0 = arith.constant 0 : i32
    %c0_i32_1 = arith.constant 0 : i32
    return %c0_i32, %arg0, %c0_i32_0 : i32, i32, i32
  }
  func.func @transform_2(%arg0: i32, %arg1: i32) -> (i32, i32, i32) {
    %c0_i32 = arith.constant 0 : i32
    %c0_i32_0 = arith.constant 0 : i32
    return %arg1, %arg0, %c0_i32 : i32, i32, i32
  }
}

</mosaic_0001>

<llo_original>
// kernel: tpu_custom_call.1
$region0: #{tpu_custom_call.1}
  #allocation0 [shape = 'u32[]', space=smem, size = 0x4, offset = 0x4, fixed_abs, tag = 'smem constant byte address 0x4 - core index']
  #allocation1 [shape = 'u32[144,128]{1,0:T(1,128)}', space=vmem, size = 0x12000, scoped, tag = 'internal scratch']
  %s0 = inlined_call_operand.hbm [shape: f32[2,2,128], index: 0, kind: input, shape index: {}]
  %s1 = inlined_call_operand.hbm [shape: f32[1,2,128], index: 1, kind: input, shape index: {}]
  %s2 = inlined_call_operand.hbm [shape: f32[2,2,128], index: 2, kind: output, shape index: {}]
  %s3 = sld [smem:[#allocation0]]
  $region26: #{tpu_custom_call.1} parent=0
    _
  %s5 = ssub.s32 1, %s3
  %s6 = scalar_select 0, %s5, %s3
  $region1: #{tpu_custom_call.1} parent=0
    #allocation2 [shape = 'u8[2048]{0}', space=vmem, size = 0x800, scoped, tag = 'input window, operand 0, single buffered']
    #allocation3 [shape = 's32[1]{0}', space=sflag, size = 0x4, scoped, tag = 'scoped memory for tpu_custom_call.1']
    #allocation4 [shape = 's32[1]{0}', space=sflag, size = 0x4, scoped, tag = 'scoped memory for tpu_custom_call.1']
    #allocation5 [shape = 'u8[1024]{0}', space=vmem, size = 0x400, scoped, tag = 'input window, operand 1, single buffered']
    #allocation6 [shape = 's32[1]{0}', space=sflag, size = 0x4, scoped, tag = 'scoped memory for tpu_custom_call.1']
    #allocation7 [shape = 'u8[2048]{0}', space=vmem, size = 0x800, scoped, tag = 'output window, operand 0, single buffered']
    %7 = vsyncpa [#allocation3], 0
    %8 = vsyncpa [#allocation6], 0
    %9 = vsyncpa [#allocation4], 0
    // Predicated region
    $region2: #{tpu_custom_call.1} parent=1 // pred_check
      _
    $region3: #{tpu_custom_call.1} parent=1 // pred_check_branch
      %11 = sbr.rel (0) target = $region5
    $region4: #{tpu_custom_call.1} parent=1 // pred_region
      %s13 = ssub.s32 64, 64
      %14 = vsyncadd [#allocation3], %s13
      %s15 = sshll.u32 [#allocation2], 4
      %s16 = int_to_ptr.vmem [resolvable:$true] %s15
      %21 = dma.hbm_to_vmem [thread:$0]  %s0, 64, %s16, [#allocation3], 32, 32, 2
    $region5: #{tpu_custom_call.1} parent=1 // pred_fallthru
      _
    // Predicated region
    $region6: #{tpu_custom_call.1} parent=1 // pred_check
      _
    $region7: #{tpu_custom_call.1} parent=1 // pred_check_branch
      %23 = sbr.rel (0) target = $region9
    $region8: #{tpu_custom_call.1} parent=1 // pred_region
      %s25 = ssub.s32 32, 32
      %26 = vsyncadd [#allocation6], %s25
      %s28 = sshll.u32 [#allocation5], 4
      %s29 = int_to_ptr.vmem [resolvable:$true] %s28
      %31 = dma.hbm_to_vmem [thread:$0]  %s1, 32, %s29, [#allocation6]
    $region9: #{tpu_custom_call.1} parent=1 // pred_fallthru
      _
    // Predicated region
    $region10: #{tpu_custom_call.1} parent=1 // pred_check
      _
    $region11: #{tpu_custom_call.1} parent=1 // pred_check_branch
      %33 = sbr.rel (0) target = $region13
    $region12: #{tpu_custom_call.1} parent=1 // pred_region
      %34 = dma.done [#allocation3], 64
    $region13: #{tpu_custom_call.1} parent=1 // pred_fallthru
      _
    // Predicated region
    $region14: #{tpu_custom_call.1} parent=1 // pred_check
      _
    $region15: #{tpu_custom_call.1} parent=1 // pred_check_branch
      %36 = sbr.rel (0) target = $region17
    $region16: #{tpu_custom_call.1} parent=1 // pred_region
      %37 = dma.done [#allocation6], 32
    $region17: #{tpu_custom_call.1} parent=1 // pred_fallthru
      _
    %v38 = vld [vmem:[#allocation2] sm:$0x3]
    %v39 = vld [vmem:[#allocation2 + $0x2] sm:$0x3]
    %v40 = vmul.f32 %v38, 5.656854
    %v41 = vmul.f32 %v39, 5.656854
    %v42 = vld [vmem:[#allocation5] sm:$0x3]
    %v43 = vadd.f32 %v40, %v42
    %v44 = vadd.f32 %v41, %v42
    %45 = vst [vmem:[#allocation7] sm:$0x3] %v43
    %46 = vst [vmem:[#allocation7 + $0x2] sm:$0x3] %v44
    // Predicated region
    $region18: #{tpu_custom_call.1} parent=1 // pred_check
      _
    $region19: #{tpu_custom_call.1} parent=1 // pred_check_branch
      %48 = sbr.rel (0) target = $region21
    $region20: #{tpu_custom_call.1} parent=1 // pred_region
      %s50 = ssub.s32 64, 64
      %51 = vsyncadd [#allocation4], %s50
      %s52 = sshll.u32 [#allocation7], 4
      %s53 = int_to_ptr.vmem [resolvable:$true] %s52
      %58 = dma.vmem_to_hbm [thread:$0]  %s53, 64, %s2, [#allocation4], 32, 32, 2
    $region21: #{tpu_custom_call.1} parent=1 // pred_fallthru
      _
    // Predicated region
    $region22: #{tpu_custom_call.1} parent=1 // pred_check
      _
    $region23: #{tpu_custom_call.1} parent=1 // pred_check_branch
      %60 = sbr.rel (0) target = $region25
    $region24: #{tpu_custom_call.1} parent=1 // pred_region
      %61 = dma.done [#allocation4], 64
    $region25: #{tpu_custom_call.1} parent=1 // pred_fallthru
      _
    %62 = vsyncpa [#allocation3], 1
    %63 = vsyncpa [#allocation6], 1
    %64 = vsyncpa [#allocation4], 1

</llo_original>
